<compile_context>
chip_gen: v5e
topology: v5e:2x2
jax: 0.10.0
libtpu: 0.0.40
codegen_flags: <defaults>
</compile_context>

<pallas_src>
import functools

import jax
import jax.numpy as jnp
from jax.experimental import pallas as pl
from jax.experimental.pallas import tpu as pltpu

FEATURE_DIM = 512
H1 = 128
H2 = 64
OUT = 1


def _round_up(n, m):
    return (n + m - 1) // m * m


def _fnet_kernel(x_ref, w1_ref, b1_ref, w2_ref, b2_ref, w3_ref, b3_ref, o_ref):
    # x_ref: (bm, F) in caller dtype (f32 or bf16)
    # w1: (F, 128) bf16   b1: (1, 128) f32
    # w2: (128, 64) bf16  b2: (1, 64)  f32
    # w3: (1, 64)   bf16  (PyTorch (out,in) row)   b3: (1, 1) f32
    # o_ref: (1, bm) f32  (lane-dense along batch)
    x = x_ref[...].astype(jnp.bfloat16)   # in-kernel cast: VPU, hidden under DMA

    # fc1 -> dropout(id) -> relu ; MXU matmul, f32 accumulate.
    h1 = jnp.dot(x, w1_ref[...], preferred_element_type=jnp.float32) + b1_ref[...]
    h1 = jnp.maximum(h1, 0.0).astype(jnp.bfloat16)

    # fc2 -> dropout(id) -> relu
    h2 = jnp.dot(h1, w2_ref[...], preferred_element_type=jnp.float32) + b2_ref[...]
    h2 = jnp.maximum(h2, 0.0).astype(jnp.bfloat16)

    # fc3: (1,64) . (bm,64)^T -> (1, bm).  Trans-B contraction keeps the batch on
    # the lane axis, so the output tile is lane-dense (no masked stores).
    out = jax.lax.dot_general(
        w3_ref[...], h2,
        dimension_numbers=(((1,), (1,)), ((), ())),
        preferred_element_type=jnp.float32) + b3_ref[...]
    o_ref[...] = out.astype(o_ref.dtype)


@functools.partial(jax.jit, static_argnames=("block_m",))
def fnet_forward(x, params, *, block_m=2048):
    """x: [B, FEATURE_DIM] float32 (or bfloat16) -> [B, 1] float32."""
    w1, b1, w2, b2, w3, b3 = params
    B, F = x.shape
    assert F == FEATURE_DIM, F

    # Tile size: multiple of 128 (lane-dense (1, bm) output block must satisfy
    # the (8,128) rule), clamped so num_tiles >= 2 when B > 128 (keeps both v7x
    # TensorCores busy via the "parallel" grid axis), and no larger than needed.
    half = _round_up(pl.cdiv(B, 2), 128)
    bm = max(128, min(_round_up(block_m, 128), half))
    num_tiles = pl.cdiv(B, bm)          # ragged tail handled by clamped DMA
    rows = num_tiles * bm

    # Small, one-time weight casts (bf16 MXU operands); biases stay f32.
    w1b = w1.astype(jnp.bfloat16)
    w2b = w2.astype(jnp.bfloat16)
    w3b = w3.T.astype(jnp.bfloat16)     # (H2, 1) -> (1, H2) row

    flops = 2 * rows * (FEATURE_DIM * H1 + H1 * H2 + H2 * OUT)
    bytes_accessed = (B * FEATURE_DIM * x.dtype.itemsize + rows * OUT * 4
                      + (FEATURE_DIM * H1 + H1 * H2 + H2 * OUT) * 2
                      + (H1 + H2 + OUT) * 4)

    out = pl.pallas_call(
        _fnet_kernel,
        out_shape=jax.ShapeDtypeStruct((num_tiles, 1, bm), jnp.float32),
        grid_spec=pltpu.PrefetchScalarGridSpec(
            num_scalar_prefetch=0,
            grid=(num_tiles,),
            in_specs=[
                pl.BlockSpec((bm, FEATURE_DIM), lambda i: (i, 0)),  # x tile
                pl.BlockSpec((FEATURE_DIM, H1), lambda i: (0, 0)),  # w1 (resident)
                pl.BlockSpec((1, H1), lambda i: (0, 0)),            # b1
                pl.BlockSpec((H1, H2), lambda i: (0, 0)),           # w2
                pl.BlockSpec((1, H2), lambda i: (0, 0)),            # b2
                pl.BlockSpec((1, H2), lambda i: (0, 0)),            # w3 row
                pl.BlockSpec((1, OUT), lambda i: (0, 0)),           # b3
            ],
            # (num_tiles, 1, bm) has the same row-major element order as (rows, 1);
            # leading dim is squeezed so the kernel sees a lane-dense (1, bm) tile.
            out_specs=pl.BlockSpec((None, 1, bm), lambda i: (i, 0, 0)),
        ),
        compiler_params=pltpu.CompilerParams(
            dimension_semantics=("parallel",),
            vmem_limit_bytes=48 * 1024 * 1024),
        cost_estimate=pl.CostEstimate(
            flops=flops, transcendentals=0, bytes_accessed=bytes_accessed),
    )(x, w1b, b1, w2b, b2, w3b, b3)

    # Garbage rows from the ragged tail block are sliced off here (rows are
    # independent; do NOT reuse this pattern if any cross-row op is added).
    return out.reshape(rows, OUT)[:B]


def init_params(key):
    """Deterministic init mimicking PyTorch nn.Linear defaults.

    w1/w2 are returned pre-transposed to (in_features, out_features); w3 is kept
    as (in, out) = (64, 1) and turned into a (1, 64) row in the wrapper.  Biases
    are (1, out_features) for 2-D VMEM layout.
    """
    def linear(k, fan_in, fan_out):
        kw, kb = jax.random.split(k)
        bound = 1.0 / jnp.sqrt(fan_in)
        w = jax.random.uniform(kw, (fan_in, fan_out), jnp.float32, -bound, bound)
        b = jax.random.uniform(kb, (1, fan_out), jnp.float32, -bound, bound)
        return w, b

    k1, k2, k3 = jax.random.split(key, 3)
    w1, b1 = linear(k1, FEATURE_DIM, H1)
    w2, b2 = linear(k2, H1, H2)
    w3, b3 = linear(k3, H2, OUT)
    return (w1, b1, w2, b2, w3, b3)


def fnet_reference(x, params):
    """Pure-JAX f32 reference for verification."""
    w1, b1, w2, b2, w3, b3 = params
    h1 = jnp.maximum(x @ w1 + b1, 0.0)
    h2 = jnp.maximum(h1 @ w2 + b2, 0.0)
    return h2 @ w3 + b3


if __name__ == "__main__":
    key = jax.random.PRNGKey(0)
    k_params, k_x1, k_x2 = jax.random.split(key, 3)
    params = init_params(k_params)

    # Small smoke test (single tile, B < bm -> clamped tail DMA).
    B1 = 8
    x1 = jax.random.normal(k_x1, (B1, FEATURE_DIM), jnp.float32)
    out1 = jax.block_until_ready(fnet_forward(x1, params))
    ref1 = fnet_reference(x1, params)
    assert out1.shape == (B1, OUT), out1.shape
    assert jnp.allclose(out1, ref1, atol=2e-2, rtol=2e-2), (
        f"max abs err = {jnp.max(jnp.abs(out1 - ref1))}")

    # Multi-tile + ragged-batch test (grid length 3, partial last x block).
    B2 = 300
    x2 = jax.random.normal(k_x2, (B2, FEATURE_DIM), jnp.float32)
    out2 = jax.block_until_ready(fnet_forward(x2, params, block_m=128))
    ref2 = fnet_reference(x2, params)
    assert out2.shape == (B2, OUT), out2.shape
    assert jnp.allclose(out2, ref2, atol=2e-2, rtol=2e-2), (
        f"max abs err = {jnp.max(jnp.abs(out2 - ref2))}")

    # Larger batch exercising the default (big-tile) config.
    B3 = 5000
    x3 = jax.random.normal(k_x2, (B3, FEATURE_DIM), jnp.float32)
    out3 = jax.block_until_ready(fnet_forward(x3, params))
    ref3 = fnet_reference(x3, params)
    assert out3.shape == (B3, OUT), out3.shape
    assert jnp.allclose(out3, ref3, atol=2e-2, rtol=2e-2), (
        f"max abs err = {jnp.max(jnp.abs(out3 - ref3))}")

    print("KERNEL_OK")
</pallas_src>

<mosaic_0001>
module attributes {stable_mosaic.version = 11 : i64} {
  func.func @_fnet_kernel(%arg0: i32, %arg1: memref<128x512xf32, #tpu.memory_space<vmem>>, %arg2: memref<512x128xbf16, #tpu.memory_space<vmem>>, %arg3: memref<1x128xf32, #tpu.memory_space<vmem>>, %arg4: memref<128x64xbf16, #tpu.memory_space<vmem>>, %arg5: memref<1x64xf32, #tpu.memory_space<vmem>>, %arg6: memref<1x64xbf16, #tpu.memory_space<vmem>>, %arg7: memref<1x1xf32, #tpu.memory_space<vmem>>, %arg8: memref<1x1x128xf32, #tpu.memory_space<vmem>>) attributes {dimension_semantics = [#tpu.dimension_semantics<parallel>], iteration_bounds = array<i64: 1>, scalar_prefetch = 0 : i64, scratch_operands = 0 : i64, tpu.core_type = #tpu.core_type<tc>, window_params = [{transform_indices = @transform_0, window_bounds = array<i64: 128, 512>}, {pipeline_mode = #tpu.pipeline_mode<synchronous>, transform_indices = @transform_1, window_bounds = array<i64: 512, 128>}, {pipeline_mode = #tpu.pipeline_mode<synchronous>, transform_indices = @transform_2, window_bounds = array<i64: 1, 128>}, {pipeline_mode = #tpu.pipeline_mode<synchronous>, transform_indices = @transform_3, window_bounds = array<i64: 128, 64>}, {pipeline_mode = #tpu.pipeline_mode<synchronous>, transform_indices = @transform_4, window_bounds = array<i64: 1, 64>}, {pipeline_mode = #tpu.pipeline_mode<synchronous>, transform_indices = @transform_5, window_bounds = array<i64: 1, 64>}, {pipeline_mode = #tpu.pipeline_mode<synchronous>, transform_indices = @transform_6, window_bounds = array<i64: 1, 1>}, {transform_indices = @transform_7, window_bounds = array<i64: 1, 1, 128>}]} {
    %c0 = arith.constant 0 : index
    %c0_0 = arith.constant 0 : index
    %0 = vector.load %arg1[%c0, %c0_0] : memref<128x512xf32, #tpu.memory_space<vmem>>, vector<128x512xf32>
    %1 = arith.truncf %0 : vector<128x512xf32> to vector<128x512xbf16>
    %c0_1 = arith.constant 0 : index
    %c0_2 = arith.constant 0 : index
    %2 = vector.load %arg2[%c0_1, %c0_2] : memref<512x128xbf16, #tpu.memory_space<vmem>>, vector<512x128xbf16>
    %cst = arith.constant dense<0.000000e+00> : vector<128x128xf32>
    %3 = tpu.matmul %1, %2, %cst {dimension_numbers = #tpu.dot_dimension_numbers<[1], [0], [0], [1], [0, 0, 1, 1], [], []>} : vector<128x512xbf16>, vector<512x128xbf16>, vector<128x128xf32> -> vector<128x128xf32>
    %c0_3 = arith.constant 0 : index
    %c0_4 = arith.constant 0 : index
    %4 = vector.load %arg3[%c0_3, %c0_4] : memref<1x128xf32, #tpu.memory_space<vmem>>, vector<1x128xf32>
    %5 = vector.broadcast %4 : vector<1x128xf32> to vector<128x128xf32>
    %6 = arith.addf %3, %5 : vector<128x128xf32>
    %cst_5 = arith.constant 0.000000e+00 : f32
    %7 = vector.broadcast %cst_5 : f32 to vector<128x128xf32>
    %8 = arith.maximumf %6, %7 : vector<128x128xf32>
    %9 = arith.truncf %8 : vector<128x128xf32> to vector<128x128xbf16>
    %c0_6 = arith.constant 0 : index
    %c0_7 = arith.constant 0 : index
    %10 = vector.load %arg4[%c0_6, %c0_7] : memref<128x64xbf16, #tpu.memory_space<vmem>>, vector<128x64xbf16>
    %cst_8 = arith.constant dense<0.000000e+00> : vector<128x64xf32>
    %11 = tpu.matmul %9, %10, %cst_8 {dimension_numbers = #tpu.dot_dimension_numbers<[1], [0], [0], [1], [0, 0, 1, 1], [], []>} : vector<128x128xbf16>, vector<128x64xbf16>, vector<128x64xf32> -> vector<128x64xf32>
    %c0_9 = arith.constant 0 : index
    %c0_10 = arith.constant 0 : index
    %12 = vector.load %arg5[%c0_9, %c0_10] : memref<1x64xf32, #tpu.memory_space<vmem>>, vector<1x64xf32>
    %13 = vector.broadcast %12 : vector<1x64xf32> to vector<128x64xf32>
    %14 = arith.addf %11, %13 : vector<128x64xf32>
    %cst_11 = arith.constant 0.000000e+00 : f32
    %15 = vector.broadcast %cst_11 : f32 to vector<128x64xf32>
    %16 = arith.maximumf %14, %15 : vector<128x64xf32>
    %17 = arith.truncf %16 : vector<128x64xf32> to vector<128x64xbf16>
    %c0_12 = arith.constant 0 : index
    %c0_13 = arith.constant 0 : index
    %18 = vector.load %arg6[%c0_12, %c0_13] : memref<1x64xbf16, #tpu.memory_space<vmem>>, vector<1x64xbf16>
    %cst_14 = arith.constant dense<0.000000e+00> : vector<1x128xf32>
    %19 = tpu.matmul %18, %17, %cst_14 {dimension_numbers = #tpu.dot_dimension_numbers<[1], [1], [0], [0], [0, 0, 1, 0], [], []>} : vector<1x64xbf16>, vector<128x64xbf16>, vector<1x128xf32> -> vector<1x128xf32>
    %c0_15 = arith.constant 0 : index
    %c0_16 = arith.constant 0 : index
    %20 = vector.load %arg7[%c0_15, %c0_16] : memref<1x1xf32, #tpu.memory_space<vmem>>, vector<1x1xf32>
    %21 = vector.broadcast %20 : vector<1x1xf32> to vector<1x128xf32>
    %22 = arith.addf %19, %21 : vector<1x128xf32>
    %c0_17 = arith.constant 0 : index
    %c0_18 = arith.constant 0 : index
    %c0_19 = arith.constant 0 : index
    %23 = vector.load %arg8[%c0_17, %c0_18, %c0_19] : memref<1x1x128xf32, #tpu.memory_space<vmem>>, vector<1x1x128xf32>
    %24 = vector.shape_cast %23 : vector<1x1x128xf32> to vector<1x128xf32>
    %25 = vector.shape_cast %22 : vector<1x128xf32> to vector<1x1x128xf32>
    tpu.vector_store %arg8[%c0_17, %c0_18, %c0_19], %25 {strides = array<i32>} : memref<1x1x128xf32, #tpu.memory_space<vmem>>, vector<1x1x128xf32>,
    return
  }
  func.func @transform_0(%arg0: i32) -> (i32, i32) {
    %c0_i32 = arith.constant 0 : i32
    %c0_i32_0 = arith.constant 0 : i32
    return %arg0, %c0_i32 : i32, i32
  }
  func.func @transform_1(%arg0: i32) -> (i32, i32) {
    %c0_i32 = arith.constant 0 : i32
    %c0_i32_0 = arith.constant 0 : i32
    %c0_i32_1 = arith.constant 0 : i32
    return %c0_i32, %c0_i32_0 : i32, i32
  }
  func.func @transform_2(%arg0: i32) -> (i32, i32) {
    %c0_i32 = arith.constant 0 : i32
    %c0_i32_0 = arith.constant 0 : i32
    %c0_i32_1 = arith.constant 0 : i32
    return %c0_i32, %c0_i32_0 : i32, i32
  }
  func.func @transform_3(%arg0: i32) -> (i32, i32) {
    %c0_i32 = arith.constant 0 : i32
    %c0_i32_0 = arith.constant 0 : i32
    %c0_i32_1 = arith.constant 0 : i32
    return %c0_i32, %c0_i32_0 : i32, i32
  }
  func.func @transform_4(%arg0: i32) -> (i32, i32) {
    %c0_i32 = arith.constant 0 : i32
    %c0_i32_0 = arith.constant 0 : i32
    %c0_i32_1 = arith.constant 0 : i32
    return %c0_i32, %c0_i32_0 : i32, i32
  }
  func.func @transform_5(%arg0: i32) -> (i32, i32) {
    %c0_i32 = arith.constant 0 : i32
    %c0_i32_0 = arith.constant 0 : i32
    %c0_i32_1 = arith.constant 0 : i32
    return %c0_i32, %c0_i32_0 : i32, i32
  }
  func.func @transform_6(%arg0: i32) -> (i32, i32) {
    %c0_i32 = arith.constant 0 : i32
    %c0_i32_0 = arith.constant 0 : i32
    %c0_i32_1 = arith.constant 0 : i32
    return %c0_i32, %c0_i32_0 : i32, i32
  }
  func.func @transform_7(%arg0: i32) -> (i32, i32, i32) {
    %c0_i32 = arith.constant 0 : i32
    %c0_i32_0 = arith.constant 0 : i32
    %c0_i32_1 = arith.constant 0 : i32
    return %arg0, %c0_i32, %c0_i32_0 : i32, i32, i32
  }
}

</mosaic_0001>

<llo_original>
// kernel: fnet_forward.1
$region0: #{fnet_forward.1}
  #allocation0 [shape = 'u32[]', space=smem, size = 0x4, offset = 0x4, fixed_abs, tag = 'smem constant byte address 0x4 - core index']
  #allocation1 [shape = 'u32[72,128]{1,0:T(1,128)}', space=vmem, size = 0x9000, scoped, tag = 'internal scratch']
  #allocation2 [shape = 'f32[1,1]{1,0:T(1,128)S(1)}', space=vmem, size = 0x200, scoped, tag = 'scoped memory for fnet_forward.1']
  %s0 = inlined_call_operand.vmem [shape: f32[8,512], index: 0, kind: input, shape index: {}]
  %s1 = inlined_call_operand.vmem [shape: bf16[512,128], index: 1, kind: input, shape index: {}]
  %s2 = inlined_call_operand.vmem [shape: f32[1,128], index: 2, kind: input, shape index: {}]
  %s3 = inlined_call_operand.vmem [shape: bf16[128,64], index: 3, kind: input, shape index: {}]
  %s4 = inlined_call_operand.vmem [shape: f32[1,64], index: 4, kind: input, shape index: {}]
  %s5 = inlined_call_operand.vmem [shape: bf16[1,64], index: 5, kind: input, shape index: {}]
  %s6 = inlined_call_operand.<no memory space> [shape: f32[1,1], index: 6, kind: input, shape index: {}]
  %s7 = inlined_call_operand.vmem [shape: f32[1,1,128], index: 7, kind: output, shape index: {}]
  %s8 = sld [smem:[#allocation0]]
  $region38: #{fnet_forward.1} parent=0
    _
  %s10 = ssub.s32 1, %s8
  %s11 = scalar_select 0, %s10, %s8
  %v12 = vstv %s6
  %13 = vst [vmem:[#allocation2] sm:$0x1] %v12
  // Predicated region
  $region2: #{fnet_forward.1} parent=0 // pred_check
    _
  $region3: #{fnet_forward.1} parent=0 // pred_check_branch
    %15 = sbr.rel (0) target = $region5
  $region4: #{fnet_forward.1} parent=0 // pred_region
    _
  $region5: #{fnet_forward.1} parent=0 // pred_fallthru
    _
  // Predicated region
  $region6: #{fnet_forward.1} parent=0 // pred_check
    _
  $region7: #{fnet_forward.1} parent=0 // pred_check_branch
    %17 = sbr.rel (0) target = $region9
  $region8: #{fnet_forward.1} parent=0 // pred_region
    _
  $region9: #{fnet_forward.1} parent=0 // pred_fallthru
    _
  // Predicated region
  $region10: #{fnet_forward.1} parent=0 // pred_check
    _
  $region11: #{fnet_forward.1} parent=0 // pred_check_branch
    %19 = sbr.rel (0) target = $region13
  $region12: #{fnet_forward.1} parent=0 // pred_region
    _
  $region13: #{fnet_forward.1} parent=0 // pred_fallthru
    _
  // Predicated region
  $region14: #{fnet_forward.1} parent=0 // pred_check
    _
  $region15: #{fnet_forward.1} parent=0 // pred_check_branch
    %21 = sbr.rel (0) target = $region17
  $region16: #{fnet_forward.1} parent=0 // pred_region
    _
  $region17: #{fnet_forward.1} parent=0 // pred_fallthru
    _
  // Predicated region
  $region18: #{fnet_forward.1} parent=0 // pred_check
    _
  $region19: #{fnet_forward.1} parent=0 // pred_check_branch
    %23 = sbr.rel (0) target = $region21
  $region20: #{fnet_forward.1} parent=0 // pred_region
    _
  $region21: #{fnet_forward.1} parent=0 // pred_fallthru
    _
  // Predicated region
  $region22: #{fnet_forward.1} parent=0 // pred_check
    _
  $region23: #{fnet_forward.1} parent=0 // pred_check_branch
    %25 = sbr.rel (0) target = $region25
  $region24: #{fnet_forward.1} parent=0 // pred_region
    _
  $region25: #{fnet_forward.1} parent=0 // pred_fallthru
    _
  // Predicated region
  $region26: #{fnet_forward.1} parent=0 // pred_check
    _
  $region27: #{fnet_forward.1} parent=0 // pred_check_branch
    %27 = sbr.rel (0) target = $region29
  $region28: #{fnet_forward.1} parent=0 // pred_region
    _
  $region29: #{fnet_forward.1} parent=0 // pred_fallthru
    _
  %v28 = vld [vmem:[%s0] sm:$0xff]
  %v29 = vld [vmem:[%s0 + $0x8] sm:$0xff]
  %v30 = vld [vmem:[%s0 + $0x10] sm:$0xff]
  %v31 = vld [vmem:[%s0 + $0x18] sm:$0xff]
  %v32 = vld [vmem:[%s0 + $0x20] sm:$0xff]
  %v33 = vld [vmem:[%s0 + $0x28] sm:$0xff]
  %v34 = vld [vmem:[%s0 + $0x30] sm:$0xff]
  %v35 = vld [vmem:[%s0 + $0x38] sm:$0xff]
  %v36 = vld [vmem:[%s0 + $0x40] sm:$0xff]
  %v37 = vld [vmem:[%s0 + $0x48] sm:$0xff]
  %v38 = vld [vmem:[%s0 + $0x50] sm:$0xff]
  %v39 = vld [vmem:[%s0 + $0x58] sm:$0xff]
  %v40 = vld [vmem:[%s0 + $0x60] sm:$0xff]
  %v41 = vld [vmem:[%s0 + $0x68] sm:$0xff]
  %v42 = vld [vmem:[%s0 + $0x70] sm:$0xff]
  %v43 = vld [vmem:[%s0 + $0x78] sm:$0xff]
  %v44 = vld [vmem:[%s0 + $0x80] sm:$0xff]
  %v45 = vld [vmem:[%s0 + $0x88] sm:$0xff]
  %v46 = vld [vmem:[%s0 + $0x90] sm:$0xff]
  %v47 = vld [vmem:[%s0 + $0x98] sm:$0xff]
  %v48 = vld [vmem:[%s0 + $0xa0] sm:$0xff]
  %v49 = vld [vmem:[%s0 + $0xa8] sm:$0xff]
  %v50 = vld [vmem:[%s0 + $0xb0] sm:$0xff]
  %v51 = vld [vmem:[%s0 + $0xb8] sm:$0xff]
  %v52 = vld [vmem:[%s0 + $0xc0] sm:$0xff]
  %v53 = vld [vmem:[%s0 + $0xc8] sm:$0xff]
  %v54 = vld [vmem:[%s0 + $0xd0] sm:$0xff]
  %v55 = vld [vmem:[%s0 + $0xd8] sm:$0xff]
  %v56 = vld [vmem:[%s0 + $0xe0] sm:$0xff]
  %v57 = vld [vmem:[%s0 + $0xe8] sm:$0xff]
  %v58 = vld [vmem:[%s0 + $0xf0] sm:$0xff]
  %v59 = vld [vmem:[%s0 + $0xf8] sm:$0xff]
  %v60 = vld [vmem:[%s0 + $0x100] sm:$0xff]
  %v61 = vld [vmem:[%s0 + $0x108] sm:$0xff]
  %v62 = vld [vmem:[%s0 + $0x110] sm:$0xff]
  %v63 = vld [vmem:[%s0 + $0x118] sm:$0xff]
  %v64 = vld [vmem:[%s0 + $0x120] sm:$0xff]
  %v65 = vld [vmem:[%s0 + $0x128] sm:$0xff]
  %v66 = vld [vmem:[%s0 + $0x130] sm:$0xff]
  %v67 = vld [vmem:[%s0 + $0x138] sm:$0xff]
  %v68 = vld [vmem:[%s0 + $0x140] sm:$0xff]
  %v69 = vld [vmem:[%s0 + $0x148] sm:$0xff]
  %v70 = vld [vmem:[%s0 + $0x150] sm:$0xff]
  %v71 = vld [vmem:[%s0 + $0x158] sm:$0xff]
  %v72 = vld [vmem:[%s0 + $0x160] sm:$0xff]
  %v73 = vld [vmem:[%s0 + $0x168] sm:$0xff]
  %v74 = vld [vmem:[%s0 + $0x170] sm:$0xff]
  %v75 = vld [vmem:[%s0 + $0x178] sm:$0xff]
  %v76 = vld [vmem:[%s0 + $0x180] sm:$0xff]
  %v77 = vld [vmem:[%s0 + $0x188] sm:$0xff]
  %v78 = vld [vmem:[%s0 + $0x190] sm:$0xff]
  %v79 = vld [vmem:[%s0 + $0x198] sm:$0xff]
  %v80 = vld [vmem:[%s0 + $0x1a0] sm:$0xff]
  %v81 = vld [vmem:[%s0 + $0x1a8] sm:$0xff]
  %v82 = vld [vmem:[%s0 + $0x1b0] sm:$0xff]
  %v83 = vld [vmem:[%s0 + $0x1b8] sm:$0xff]
  %v84 = vld [vmem:[%s0 + $0x1c0] sm:$0xff]
  %v85 = vld [vmem:[%s0 + $0x1c8] sm:$0xff]
  %v86 = vld [vmem:[%s0 + $0x1d0] sm:$0xff]
  %v87 = vld [vmem:[%s0 + $0x1d8] sm:$0xff]
  %v88 = vld [vmem:[%s0 + $0x1e0] sm:$0xff]
  %v89 = vld [vmem:[%s0 + $0x1e8] sm:$0xff]
  %v90 = vld [vmem:[%s0 + $0x1f0] sm:$0xff]
  %v91 = vld [vmem:[%s0 + $0x1f8] sm:$0xff]
  %v92 = vpack.c.bf16 %v32, %v28
  %v93 = vpack.c.bf16 %v33, %v29
  %v94 = vpack.c.bf16 %v34, %v30
  %v95 = vpack.c.bf16 %v35, %v31
  %v96 = vpack.c.bf16 %v40, %v36
  %v97 = vpack.c.bf16 %v41, %v37
  %v98 = vpack.c.bf16 %v42, %v38
  %v99 = vpack.c.bf16 %v43, %v39
  %v100 = vpack.c.bf16 %v48, %v44
  %v101 = vpack.c.bf16 %v49, %v45
  %v102 = vpack.c.bf16 %v50, %v46
  %v103 = vpack.c.bf16 %v51, %v47
  %v104 = vpack.c.bf16 %v56, %v52
  %v105 = vpack.c.bf16 %v57, %v53
  %v106 = vpack.c.bf16 %v58, %v54
  %v107 = vpack.c.bf16 %v59, %v55
  %v108 = vpack.c.bf16 %v64, %v60
  %v109 = vpack.c.bf16 %v65, %v61
  %v110 = vpack.c.bf16 %v66, %v62
  %v111 = vpack.c.bf16 %v67, %v63
  %v112 = vpack.c.bf16 %v72, %v68
  %v113 = vpack.c.bf16 %v73, %v69
  %v114 = vpack.c.bf16 %v74, %v70
  %v115 = vpack.c.bf16 %v75, %v71
  %v116 = vpack.c.bf16 %v80, %v76
  %v117 = vpack.c.bf16 %v81, %v77
  %v118 = vpack.c.bf16 %v82, %v78
  %v119 = vpack.c.bf16 %v83, %v79
  %v120 = vpack.c.bf16 %v88, %v84
  %v121 = vpack.c.bf16 %v89, %v85
  %v122 = vpack.c.bf16 %v90, %v86
  %v123 = vpack.c.bf16 %v91, %v87
  %v124 = vld [vmem:[%s1] sm:$0xf]
  %v125 = vld [vmem:[%s1 + $0x4] sm:$0xf]
  %v126 = vld [vmem:[%s1 + $0x8] sm:$0xf]
  %v127 = vld [vmem:[%s1 + $0xc] sm:$0xf]
  %v128 = vld [vmem:[%s1 + $0x10] sm:$0xf]
  %v129 = vld [vmem:[%s1 + $0x14] sm:$0xf]
  %v130 = vld [vmem:[%s1 + $0x18] sm:$0xf]
  %v131 = vld [vmem:[%s1 + $0x1c] sm:$0xf]
  %v132 = vld [vmem:[%s1 + $0x20] sm:$0xf]
  %v133 = vld [vmem:[%s1 + $0x24] sm:$0xf]
  %v134 = vld [vmem:[%s1 + $0x28] sm:$0xf]
  %v135 = vld [vmem:[%s1 + $0x2c] sm:$0xf]
  %v136 = vld [vmem:[%s1 + $0x30] sm:$0xf]
  %v137 = vld [vmem:[%s1 + $0x34] sm:$0xf]
  %v138 = vld [vmem:[%s1 + $0x38] sm:$0xf]
  %v139 = vld [vmem:[%s1 + $0x3c] sm:$0xf]
  %v140 = vld [vmem:[%s1 + $0x40] sm:$0xf]
  %v141 = vld [vmem:[%s1 + $0x44] sm:$0xf]
  %v142 = vld [vmem:[%s1 + $0x48] sm:$0xf]
  %v143 = vld [vmem:[%s1 + $0x4c] sm:$0xf]
  %v144 = vld [vmem:[%s1 + $0x50] sm:$0xf]
  %v145 = vld [vmem:[%s1 + $0x54] sm:$0xf]
  %v146 = vld [vmem:[%s1 + $0x58] sm:$0xf]
  %v147 = vld [vmem:[%s1 + $0x5c] sm:$0xf]
  %v148 = vld [vmem:[%s1 + $0x60] sm:$0xf]
  %v149 = vld [vmem:[%s1 + $0x64] sm:$0xf]
  %v150 = vld [vmem:[%s1 + $0x68] sm:$0xf]
  %v151 = vld [vmem:[%s1 + $0x6c] sm:$0xf]
  %v152 = vld [vmem:[%s1 + $0x70] sm:$0xf]
  %v153 = vld [vmem:[%s1 + $0x74] sm:$0xf]
  %v154 = vld [vmem:[%s1 + $0x78] sm:$0xf]
  %v155 = vld [vmem:[%s1 + $0x7c] sm:$0xf]
  %v156 = vld [vmem:[%s1 + $0x80] sm:$0xf]
  %v157 = vld [vmem:[%s1 + $0x84] sm:$0xf]
  %v158 = vld [vmem:[%s1 + $0x88] sm:$0xf]
  %v159 = vld [vmem:[%s1 + $0x8c] sm:$0xf]
  %v160 = vld [vmem:[%s1 + $0x90] sm:$0xf]
  %v161 = vld [vmem:[%s1 + $0x94] sm:$0xf]
  %v162 = vld [vmem:[%s1 + $0x98] sm:$0xf]
  %v163 = vld [vmem:[%s1 + $0x9c] sm:$0xf]
  %v164 = vld [vmem:[%s1 + $0xa0] sm:$0xf]
  %v165 = vld [vmem:[%s1 + $0xa4] sm:$0xf]
  %v166 = vld [vmem:[%s1 + $0xa8] sm:$0xf]
  %v167 = vld [vmem:[%s1 + $0xac] sm:$0xf]
  %v168 = vld [vmem:[%s1 + $0xb0] sm:$0xf]
  %v169 = vld [vmem:[%s1 + $0xb4] sm:$0xf]
  %v170 = vld [vmem:[%s1 + $0xb8] sm:$0xf]
  %v171 = vld [vmem:[%s1 + $0xbc] sm:$0xf]
  %v172 = vld [vmem:[%s1 + $0xc0] sm:$0xf]
  %v173 = vld [vmem:[%s1 + $0xc4] sm:$0xf]
  %v174 = vld [vmem:[%s1 + $0xc8] sm:$0xf]
  %v175 = vld [vmem:[%s1 + $0xcc] sm:$0xf]
  %v176 = vld [vmem:[%s1 + $0xd0] sm:$0xf]
  %v177 = vld [vmem:[%s1 + $0xd4] sm:$0xf]
  %v178 = vld [vmem:[%s1 + $0xd8] sm:$0xf]
  %v179 = vld [vmem:[%s1 + $0xdc] sm:$0xf]
  %v180 = vld [vmem:[%s1 + $0xe0] sm:$0xf]
  %v181 = vld [vmem:[%s1 + $0xe4] sm:$0xf]
  %v182 = vld [vmem:[%s1 + $0xe8] sm:$0xf]
  %v183 = vld [vmem:[%s1 + $0xec] sm:$0xf]
  %v184 = vld [vmem:[%s1 + $0xf0] sm:$0xf]
  %v185 = vld [vmem:[%s1 + $0xf4] sm:$0xf]
  %v186 = vld [vmem:[%s1 + $0xf8] sm:$0xf]
  %v187 = vld [vmem:[%s1 + $0xfc] sm:$0xf]
  %v188 = vld [vmem:[%s2] sm:$0x1]
  %v190 = vperm.slane %v188, 0
  %v256 = vunpack.c.l.b16 %v124
  %v257 = vunpack.c.l.b16 %v125
  %v258 = vunpack.c.l.b16 %v126
  %v259 = vunpack.c.l.b16 %v127
  %v260 = vunpack.c.l.b16 %v128
  %v261 = vunpack.c.l.b16 %v129
  %v262 = vunpack.c.l.b16 %v130
  %v263 = vunpack.c.l.b16 %v131
  %v264 = vunpack.c.l.b16 %v132
  %v265 = vunpack.c.l.b16 %v133
  %v266 = vunpack.c.l.b16 %v134
  %v267 = vunpack.c.l.b16 %v135
  %v268 = vunpack.c.l.b16 %v136
  %v269 = vunpack.c.l.b16 %v137
  %v270 = vunpack.c.l.b16 %v138
  %v271 = vunpack.c.l.b16 %v139
  %v272 = vunpack.c.l.b16 %v140
  %v273 = vunpack.c.l.b16 %v141
  %v274 = vunpack.c.l.b16 %v142
  %v275 = vunpack.c.l.b16 %v143
  %v276 = vunpack.c.l.b16 %v144
  %v277 = vunpack.c.l.b16 %v145
  %v278 = vunpack.c.l.b16 %v146
  %v279 = vunpack.c.l.b16 %v147
  %v280 = vunpack.c.l.b16 %v148
  %v281 = vunpack.c.l.b16 %v149
  %v282 = vunpack.c.l.b16 %v150
  %v283 = vunpack.c.l.b16 %v151
  %v284 = vunpack.c.l.b16 %v152
  %v285 = vunpack.c.l.b16 %v153
  %v286 = vunpack.c.l.b16 %v154
  %v287 = vunpack.c.l.b16 %v155
  %v288 = vunpack.c.l.b16 %v156
  %v289 = vunpack.c.l.b16 %v157
  %v290 = vunpack.c.l.b16 %v158
  %v291 = vunpack.c.l.b16 %v159
  %v292 = vunpack.c.l.b16 %v160
  %v293 = vunpack.c.l.b16 %v161
  %v294 = vunpack.c.l.b16 %v162
  %v295 = vunpack.c.l.b16 %v163
  %v296 = vunpack.c.l.b16 %v164
  %v297 = vunpack.c.l.b16 %v165
  %v298 = vunpack.c.l.b16 %v166
  %v299 = vunpack.c.l.b16 %v167
  %v300 = vunpack.c.l.b16 %v168
  %v301 = vunpack.c.l.b16 %v169
  %v302 = vunpack.c.l.b16 %v170
  %v303 = vunpack.c.l.b16 %v171
  %v304 = vunpack.c.l.b16 %v172
  %v305 = vunpack.c.l.b16 %v173
  %v306 = vunpack.c.l.b16 %v174
  %v307 = vunpack.c.l.b16 %v175
  %v308 = vunpack.c.l.b16 %v176
  %v309 = vunpack.c.l.b16 %v177
  %v310 = vunpack.c.l.b16 %v178
  %v311 = vunpack.c.l.b16 %v179
  %v312 = vunpack.c.l.b16 %v180
  %v313 = vunpack.c.l.b16 %v181
  %v314 = vunpack.c.l.b16 %v182
  %v315 = vunpack.c.l.b16 %v183
  %v316 = vunpack.c.l.b16 %v184
  %v317 = vunpack.c.l.b16 %v185
  %v318 = vunpack.c.l.b16 %v186
  %v319 = vunpack.c.l.b16 %v187
  %v320 = vpack.c.b16 %v257, %v256
  %v321 = vpack.c.b16 %v259, %v258
  %v322 = vpack.c.b16 %v261, %v260
  %v323 = vpack.c.b16 %v263, %v262
  %v324 = vpack.c.b16 %v265, %v264
  %v325 = vpack.c.b16 %v267, %v266
  %v326 = vpack.c.b16 %v269, %v268
  %v327 = vpack.c.b16 %v271, %v270
  %v328 = vpack.c.b16 %v273, %v272
  %v329 = vpack.c.b16 %v275, %v274
  %v330 = vpack.c.b16 %v277, %v276
  %v331 = vpack.c.b16 %v279, %v278
  %v332 = vpack.c.b16 %v281, %v280
  %v333 = vpack.c.b16 %v283, %v282
  %v334 = vpack.c.b16 %v285, %v284
  %v335 = vpack.c.b16 %v287, %v286
  %v336 = vpack.c.b16 %v289, %v288
  %v337 = vpack.c.b16 %v291, %v290
  %v338 = vpack.c.b16 %v293, %v292
  %v339 = vpack.c.b16 %v295, %v294
  %v340 = vpack.c.b16 %v297, %v296
  %v341 = vpack.c.b16 %v299, %v298
  %v342 = vpack.c.b16 %v301, %v300
  %v343 = vpack.c.b16 %v303, %v302
  %v344 = vpack.c.b16 %v305, %v304
  %v345 = vpack.c.b16 %v307, %v306
  %v346 = vpack.c.b16 %v309, %v308
  %v347 = vpack.c.b16 %v311, %v310
  %v348 = vpack.c.b16 %v313, %v312
  %v349 = vpack.c.b16 %v315, %v314
  %v350 = vpack.c.b16 %v317, %v316
  %v351 = vpack.c.b16 %v319, %v318
  %384 = vmatpush.bf16.msra.mxu0 %v327
  %385 = vmatpush.bf16.msra.mxu0 %v326
  %386 = vmatpush.bf16.msra.mxu0 %v325
  %387 = vmatpush.bf16.msra.mxu0 %v324
  %388 = vmatpush.bf16.msra.mxu0 %v323
  %389 = vmatpush.bf16.msra.mxu0 %v322
  %390 = vmatpush.bf16.msra.mxu0 %v321
  %391 = vmatpush.bf16.msra.mxu0 %v320
  %392 = vmatmul.bf16.gmra.mxu0 %v92
  %v393 = vpop.f32.mrf.mxu0
  %v394 = vadd.f32 %v190, %v393
  %v395 = vpop.f32.mrf.mxu0
  %v396 = vadd.f32 %v190, %v395
  %397 = vmatmul.bf16.gmra.mxu0 %v96
  %v398 = vpop.f32.mrf.mxu0
  %v399 = vadd.f32 %v190, %v398
  %v400 = vpop.f32.mrf.mxu0
  %v401 = vadd.f32 %v190, %v400
  %402 = vmatmul.bf16.gmra.mxu0 %v100
  %v403 = vpop.f32.mrf.mxu0
  %v404 = vadd.f32 %v190, %v403
  %v405 = vpop.f32.mrf.mxu0
  %v406 = vadd.f32 %v190, %v405
  %407 = vmatmul.bf16.gmra.mxu0 %v104
  %v408 = vpop.f32.mrf.mxu0
  %v409 = vadd.f32 %v190, %v408
  %v410 = vpop.f32.mrf.mxu0
  %v411 = vadd.f32 %v190, %v410
  %412 = vmatmul.bf16.gmra.mxu0 %v108
  %v413 = vpop.f32.mrf.mxu0
  %v414 = vadd.f32 %v190, %v413
  %v415 = vpop.f32.mrf.mxu0
  %v416 = vadd.f32 %v190, %v415
  %417 = vmatmul.bf16.gmra.mxu0 %v112
  %v418 = vpop.f32.mrf.mxu0
  %v419 = vadd.f32 %v190, %v418
  %v420 = vpop.f32.mrf.mxu0
  %v421 = vadd.f32 %v190, %v420
  %422 = vmatmul.bf16.gmra.mxu0 %v116
  %v423 = vpop.f32.mrf.mxu0
  %v424 = vadd.f32 %v190, %v423
  %v425 = vpop.f32.mrf.mxu0
  %v426 = vadd.f32 %v190, %v425
  %427 = vmatmul.bf16.gmra.mxu0 %v120
  %v428 = vpop.f32.mrf.mxu0
  %v429 = vadd.f32 %v190, %v428
  %v430 = vpop.f32.mrf.mxu0
  %v431 = vadd.f32 %v190, %v430
  %432 = vdwg.mxu0
  %433 = vmatpush.bf16.msra.mxu0 %v335
  %434 = vmatpush.bf16.msra.mxu0 %v334
  %435 = vmatpush.bf16.msra.mxu0 %v333
  %436 = vmatpush.bf16.msra.mxu0 %v332
  %437 = vmatpush.bf16.msra.mxu0 %v331
  %438 = vmatpush.bf16.msra.mxu0 %v330
  %439 = vmatpush.bf16.msra.mxu0 %v329
  %440 = vmatpush.bf16.msra.mxu0 %v328
  %441 = vmatmul.bf16.gmra.mxu0 %v93
  %v442 = vpop.f32.mrf.mxu0
  %v443 = vadd.f32 %v394, %v442
  %v444 = vpop.f32.mrf.mxu0
  %v445 = vadd.f32 %v396, %v444
  %446 = vmatmul.bf16.gmra.mxu0 %v97
  %v447 = vpop.f32.mrf.mxu0
  %v448 = vadd.f32 %v399, %v447
  %v449 = vpop.f32.mrf.mxu0
  %v450 = vadd.f32 %v401, %v449
  %451 = vmatmul.bf16.gmra.mxu0 %v101
  %v452 = vpop.f32.mrf.mxu0
  %v453 = vadd.f32 %v404, %v452
  %v454 = vpop.f32.mrf.mxu0
  %v455 = vadd.f32 %v406, %v454
  %456 = vmatmul.bf16.gmra.mxu0 %v105
  %v457 = vpop.f32.mrf.mxu0
  %v458 = vadd.f32 %v409, %v457
  %v459 = vpop.f32.mrf.mxu0
  %v460 = vadd.f32 %v411, %v459
  %461 = vmatmul.bf16.gmra.mxu0 %v109
  %v462 = vpop.f32.mrf.mxu0
  %v463 = vadd.f32 %v414, %v462
  %v464 = vpop.f32.mrf.mxu0
  %v465 = vadd.f32 %v416, %v464
  %466 = vmatmul.bf16.gmra.mxu0 %v113
  %v467 = vpop.f32.mrf.mxu0
  %v468 = vadd.f32 %v419, %v467
  %v469 = vpop.f32.mrf.mxu0
  %v470 = vadd.f32 %v421, %v469
  %471 = vmatmul.bf16.gmra.mxu0 %v117
  %v472 = vpop.f32.mrf.mxu0
  %v473 = vadd.f32 %v424, %v472
  %v474 = vpop.f32.mrf.mxu0
  %v475 = vadd.f32 %v426, %v474
  %476 = vmatmul.bf16.gmra.mxu0 %v121
  %v477 = vpop.f32.mrf.mxu0
  %v478 = vadd.f32 %v429, %v477
  %v479 = vpop.f32.mrf.mxu0
  %v480 = vadd.f32 %v431, %v479
  %481 = vdwg.mxu0
  %482 = vmatpush.bf16.msra.mxu0 %v343
  %483 = vmatpush.bf16.msra.mxu0 %v342
  %484 = vmatpush.bf16.msra.mxu0 %v341
  %485 = vmatpush.bf16.msra.mxu0 %v340
  %486 = vmatpush.bf16.msra.mxu0 %v339
  %487 = vmatpush.bf16.msra.mxu0 %v338
  %488 = vmatpush.bf16.msra.mxu0 %v337
  %489 = vmatpush.bf16.msra.mxu0 %v336
  %490 = vmatmul.bf16.gmra.mxu0 %v94
  %v491 = vpop.f32.mrf.mxu0
  %v492 = vadd.f32 %v443, %v491
  %v493 = vpop.f32.mrf.mxu0
  %v494 = vadd.f32 %v445, %v493
  %495 = vmatmul.bf16.gmra.mxu0 %v98
  %v496 = vpop.f32.mrf.mxu0
  %v497 = vadd.f32 %v448, %v496
  %v498 = vpop.f32.mrf.mxu0
  %v499 = vadd.f32 %v450, %v498
  %500 = vmatmul.bf16.gmra.mxu0 %v102
  %v501 = vpop.f32.mrf.mxu0
  %v502 = vadd.f32 %v453, %v501
  %v503 = vpop.f32.mrf.mxu0
  %v504 = vadd.f32 %v455, %v503
  %505 = vmatmul.bf16.gmra.mxu0 %v106
  %v506 = vpop.f32.mrf.mxu0
  %v507 = vadd.f32 %v458, %v506
  %v508 = vpop.f32.mrf.mxu0
  %v509 = vadd.f32 %v460, %v508
  %510 = vmatmul.bf16.gmra.mxu0 %v110
  %v511 = vpop.f32.mrf.mxu0
  %v512 = vadd.f32 %v463, %v511
  %v513 = vpop.f32.mrf.mxu0
  %v514 = vadd.f32 %v465, %v513
  %515 = vmatmul.bf16.gmra.mxu0 %v114
  %v516 = vpop.f32.mrf.mxu0
  %v517 = vadd.f32 %v468, %v516
  %v518 = vpop.f32.mrf.mxu0
  %v519 = vadd.f32 %v470, %v518
  %520 = vmatmul.bf16.gmra.mxu0 %v118
  %v521 = vpop.f32.mrf.mxu0
  %v522 = vadd.f32 %v473, %v521
  %v523 = vpop.f32.mrf.mxu0
  %v524 = vadd.f32 %v475, %v523
  %525 = vmatmul.bf16.gmra.mxu0 %v122
  %v526 = vpop.f32.mrf.mxu0
  %v527 = vadd.f32 %v478, %v526
  %v528 = vpop.f32.mrf.mxu0
  %v529 = vadd.f32 %v480, %v528
  %530 = vdwg.mxu0
  %531 = vmatpush.bf16.msra.mxu0 %v351
  %532 = vmatpush.bf16.msra.mxu0 %v350
  %533 = vmatpush.bf16.msra.mxu0 %v349
  %534 = vmatpush.bf16.msra.mxu0 %v348
  %535 = vmatpush.bf16.msra.mxu0 %v347
  %536 = vmatpush.bf16.msra.mxu0 %v346
  %537 = vmatpush.bf16.msra.mxu0 %v345
  %538 = vmatpush.bf16.msra.mxu0 %v344
  %539 = vmatmul.bf16.gmra.mxu0 %v95
  %v540 = vpop.f32.mrf.mxu0
  %v541 = vadd.f32 %v492, %v540
  %v542 = vpop.f32.mrf.mxu0
  %v543 = vadd.f32 %v494, %v542
  %544 = vmatmul.bf16.gmra.mxu0 %v99
  %v545 = vpop.f32.mrf.mxu0
  %v546 = vadd.f32 %v497, %v545
  %v547 = vpop.f32.mrf.mxu0
  %v548 = vadd.f32 %v499, %v547
  %549 = vmatmul.bf16.gmra.mxu0 %v103
  %v550 = vpop.f32.mrf.mxu0
  %v551 = vadd.f32 %v502, %v550
  %v552 = vpop.f32.mrf.mxu0
  %v553 = vadd.f32 %v504, %v552
  %554 = vmatmul.bf16.gmra.mxu0 %v107
  %v555 = vpop.f32.mrf.mxu0
  %v556 = vadd.f32 %v507, %v555
  %v557 = vpop.f32.mrf.mxu0
  %v558 = vadd.f32 %v509, %v557
  %559 = vmatmul.bf16.gmra.mxu0 %v111
  %v560 = vpop.f32.mrf.mxu0
  %v561 = vadd.f32 %v512, %v560
  %v562 = vpop.f32.mrf.mxu0
  %v563 = vadd.f32 %v514, %v562
  %564 = vmatmul.bf16.gmra.mxu0 %v115
  %v565 = vpop.f32.mrf.mxu0
  %v566 = vadd.f32 %v517, %v565
  %v567 = vpop.f32.mrf.mxu0
  %v568 = vadd.f32 %v519, %v567
  %569 = vmatmul.bf16.gmra.mxu0 %v119
  %v570 = vpop.f32.mrf.mxu0
  %v571 = vadd.f32 %v522, %v570
  %v572 = vpop.f32.mrf.mxu0
  %v573 = vadd.f32 %v524, %v572
  %574 = vmatmul.bf16.gmra.mxu0 %v123
  %v575 = vpop.f32.mrf.mxu0
  %v576 = vadd.f32 %v527, %v575
  %v577 = vpop.f32.mrf.mxu0
  %v578 = vadd.f32 %v529, %v577
  %579 = vdwg.mxu0
  %v580 = vmax.f32 %v541, 0.0
  %v581 = vmax.f32 %v543, 0.0
  %v582 = vmax.f32 %v546, 0.0
  %v583 = vmax.f32 %v548, 0.0
  %v584 = vmax.f32 %v551, 0.0
  %v585 = vmax.f32 %v553, 0.0
  %v586 = vmax.f32 %v556, 0.0
  %v587 = vmax.f32 %v558, 0.0
  %v588 = vmax.f32 %v561, 0.0
  %v589 = vmax.f32 %v563, 0.0
  %v590 = vmax.f32 %v566, 0.0
  %v591 = vmax.f32 %v568, 0.0
  %v592 = vmax.f32 %v571, 0.0
  %v593 = vmax.f32 %v573, 0.0
  %v594 = vmax.f32 %v576, 0.0
  %v595 = vmax.f32 %v578, 0.0
  %v596 = vpack.c.bf16 %v581, %v580
  %v597 = vpack.c.bf16 %v583, %v582
  %v598 = vpack.c.bf16 %v585, %v584
  %v599 = vpack.c.bf16 %v587, %v586
  %v600 = vpack.c.bf16 %v589, %v588
  %v601 = vpack.c.bf16 %v591, %v590
  %v602 = vpack.c.bf16 %v593, %v592
  %v603 = vpack.c.bf16 %v595, %v594
  %v604 = vld [vmem:[%s3] sm:$0xf]
  %v605 = vld [vmem:[%s3 + $0x4] sm:$0xf]
  %v606 = vld [vmem:[%s3 + $0x8] sm:$0xf]
  %v607 = vld [vmem:[%s3 + $0xc] sm:$0xf]
  %v608 = vld [vmem:[%s3 + $0x10] sm:$0xf]
  %v609 = vld [vmem:[%s3 + $0x14] sm:$0xf]
  %v610 = vld [vmem:[%s3 + $0x18] sm:$0xf]
  %v611 = vld [vmem:[%s3 + $0x1c] sm:$0xf]
  %v612 = vld [vmem:[%s3 + $0x20] sm:$0xf]
  %v613 = vld [vmem:[%s3 + $0x24] sm:$0xf]
  %v614 = vld [vmem:[%s3 + $0x28] sm:$0xf]
  %v615 = vld [vmem:[%s3 + $0x2c] sm:$0xf]
  %v616 = vld [vmem:[%s3 + $0x30] sm:$0xf]
  %v617 = vld [vmem:[%s3 + $0x34] sm:$0xf]
  %v618 = vld [vmem:[%s3 + $0x38] sm:$0xf]
  %v619 = vld [vmem:[%s3 + $0x3c] sm:$0xf]
  %v620 = vld [vmem:[%s4] sm:$0x1]
  %v622 = vperm.slane %v620, 0
  %v640 = vunpack.c.l.b16 %v604
  %v641 = vunpack.c.l.b16 %v605
  %v642 = vunpack.c.l.b16 %v606
  %v643 = vunpack.c.l.b16 %v607
  %v644 = vunpack.c.l.b16 %v608
  %v645 = vunpack.c.l.b16 %v609
  %v646 = vunpack.c.l.b16 %v610
  %v647 = vunpack.c.l.b16 %v611
  %v648 = vunpack.c.l.b16 %v612
  %v649 = vunpack.c.l.b16 %v613
  %v650 = vunpack.c.l.b16 %v614
  %v651 = vunpack.c.l.b16 %v615
  %v652 = vunpack.c.l.b16 %v616
  %v653 = vunpack.c.l.b16 %v617
  %v654 = vunpack.c.l.b16 %v618
  %v655 = vunpack.c.l.b16 %v619
  %v656 = vpack.c.b16 %v641, %v640
  %v657 = vpack.c.b16 %v643, %v642
  %v658 = vpack.c.b16 %v645, %v644
  %v659 = vpack.c.b16 %v647, %v646
  %v660 = vpack.c.b16 %v649, %v648
  %v661 = vpack.c.b16 %v651, %v650
  %v662 = vpack.c.b16 %v653, %v652
  %v663 = vpack.c.b16 %v655, %v654
  %672 = vmatpush.bf16.msra.mxu0 %v663
  %673 = vmatpush.bf16.msra.mxu0 %v662
  %674 = vmatpush.bf16.msra.mxu0 %v661
  %675 = vmatpush.bf16.msra.mxu0 %v660
  %676 = vmatpush.bf16.msra.mxu0 %v659
  %677 = vmatpush.bf16.msra.mxu0 %v658
  %678 = vmatpush.bf16.msra.mxu0 %v657
  %679 = vmatpush.bf16.msra.mxu0 %v656
  %680 = vmatmul.bf16.gmra.mxu0 %v596
  %v681 = vpop.f32.mrf.mxu0
  %v682 = vadd.f32 %v622, %v681
  %v683 = vpop.f32.mrf.mxu0
  %v684 = vadd.f32 %v622, %v683
  %685 = vmatmul.bf16.gmra.mxu0 %v597
  %v686 = vpop.f32.mrf.mxu0
  %v687 = vadd.f32 %v622, %v686
  %v688 = vpop.f32.mrf.mxu0
  %v689 = vadd.f32 %v622, %v688
  %690 = vmatmul.bf16.gmra.mxu0 %v598
  %v691 = vpop.f32.mrf.mxu0
  %v692 = vadd.f32 %v622, %v691
  %v693 = vpop.f32.mrf.mxu0
  %v694 = vadd.f32 %v622, %v693
  %695 = vmatmul.bf16.gmra.mxu0 %v599
  %v696 = vpop.f32.mrf.mxu0
  %v697 = vadd.f32 %v622, %v696
  %v698 = vpop.f32.mrf.mxu0
  %v699 = vadd.f32 %v622, %v698
  %700 = vmatmul.bf16.gmra.mxu0 %v600
  %v701 = vpop.f32.mrf.mxu0
  %v702 = vadd.f32 %v622, %v701
  %v703 = vpop.f32.mrf.mxu0
  %v704 = vadd.f32 %v622, %v703
  %705 = vmatmul.bf16.gmra.mxu0 %v601
  %v706 = vpop.f32.mrf.mxu0
  %v707 = vadd.f32 %v622, %v706
  %v708 = vpop.f32.mrf.mxu0
  %v709 = vadd.f32 %v622, %v708
  %710 = vmatmul.bf16.gmra.mxu0 %v602
  %v711 = vpop.f32.mrf.mxu0
  %v712 = vadd.f32 %v622, %v711
  %v713 = vpop.f32.mrf.mxu0
  %v714 = vadd.f32 %v622, %v713
  %715 = vmatmul.bf16.gmra.mxu0 %v603
  %v716 = vpop.f32.mrf.mxu0
  %v717 = vadd.f32 %v622, %v716
  %v718 = vpop.f32.mrf.mxu0
  %v719 = vadd.f32 %v622, %v718
  %720 = vdwg.mxu0
  %v721 = vmax.f32 %v682, 0.0
  %v722 = vmax.f32 %v684, 0.0
  %v723 = vmax.f32 %v687, 0.0
  %v724 = vmax.f32 %v689, 0.0
  %v725 = vmax.f32 %v692, 0.0
  %v726 = vmax.f32 %v694, 0.0
  %v727 = vmax.f32 %v697, 0.0
  %v728 = vmax.f32 %v699, 0.0
  %v729 = vmax.f32 %v702, 0.0
  %v730 = vmax.f32 %v704, 0.0
  %v731 = vmax.f32 %v707, 0.0
  %v732 = vmax.f32 %v709, 0.0
  %v733 = vmax.f32 %v712, 0.0
  %v734 = vmax.f32 %v714, 0.0
  %v735 = vmax.f32 %v717, 0.0
  %v736 = vmax.f32 %v719, 0.0
  %v737 = vpack.c.bf16 %v722, %v721
  %v738 = vpack.c.bf16 %v724, %v723
  %v739 = vpack.c.bf16 %v726, %v725
  %v740 = vpack.c.bf16 %v728, %v727
  %v741 = vpack.c.bf16 %v730, %v729
  %v742 = vpack.c.bf16 %v732, %v731
  %v743 = vpack.c.bf16 %v734, %v733
  %v744 = vpack.c.bf16 %v736, %v735
  %v745 = vld [vmem:[%s5] sm:$0x1]
  %v746 = vld [vmem:[#allocation2] sm:$0x1]
  %748 = vset.pattern.permute.xlu0 0
  %749 = vperm.xlu0 %748, %v746
  %v750 = vpop.permute.xlu0 %749
  %v752 = vperm.slane %v750, 0
  %vm753 = vcmask 523264
  %v755 = vsel %vm753, %v745, 0
  %v758 = vsel %vm753, %v737, 0
  %v761 = vsel %vm753, %v738, 0
  %v764 = vsel %vm753, %v739, 0
  %v767 = vsel %vm753, %v740, 0
  %v770 = vsel %vm753, %v741, 0
  %v773 = vsel %vm753, %v742, 0
  %v776 = vsel %vm753, %v743, 0
  %v779 = vsel %vm753, %v744, 0
  %781 = vmatpush.bf16.xpose.msra.mxu0 %v779
  %782 = vmatpush.bf16.xpose.msra.mxu0 %v776
  %783 = vmatpush.bf16.xpose.msra.mxu0 %v773
  %784 = vmatpush.bf16.xpose.msra.mxu0 %v770
  %785 = vmatpush.bf16.xpose.msra.mxu0 %v767
  %786 = vmatpush.bf16.xpose.msra.mxu0 %v764
  %787 = vmatpush.bf16.xpose.msra.mxu0 %v761
  %788 = vmatpush.bf16.xpose.msra.mxu0 %v758
  %789 = vmatmul.bf16.gmra.mxu0 %v755
  %v790 = vpop.f32.mrf.mxu0
  %v791 = vadd.f32 %v752, %v790
  %v792 = vpop.f32.mrf.mxu0
  %793 = vdwg.mxu0
  %794 = vst [vmem:[%s7] sm:$0x1] %v791
  // Predicated region
  $region30: #{fnet_forward.1} parent=0 // pred_check
    _
  $region31: #{fnet_forward.1} parent=0 // pred_check_branch
    %796 = sbr.rel (0) target = $region33
  $region32: #{fnet_forward.1} parent=0 // pred_region
    _
  $region33: #{fnet_forward.1} parent=0 // pred_fallthru
    _
  // Predicated region
  $region34: #{fnet_forward.1} parent=0 // pred_check
    _
  $region35: #{fnet_forward.1} parent=0 // pred_check_branch
    %798 = sbr.rel (0) target = $region37
  $region36: #{fnet_forward.1} parent=0 // pred_region
    _
  $region37: #{fnet_forward.1} parent=0 // pred_fallthru
    _

</llo_original>
